<compile_context>
chip_gen: v7x
topology: tpu7x:2x2x1
jax: 0.10.0
libtpu: 0.0.40
codegen_flags: <defaults>
</compile_context>

<pallas_src>
import functools
import math

import jax
import jax.numpy as jnp
from jax.experimental import pallas as pl
from jax.experimental.pallas import tpu as pltpu

NU = 0.01 / math.pi
HIDDEN = 20


def burgers_pinn_kernel(pts_c_ref, pts_ib_ref, wmat_ref, wvec_ref, out_ref, buf_ref,
                        *, tile_n, ib_pad):
    T = tile_n                                   # collocation lanes in this block
    IB = ib_pad                                  # initial+boundary lanes (all blocks see them,
                                                 # but only block 0 counts them in the loss)
    n_val = T + IB                               # [collocation values | IC/BC values]

    pts_c = pts_c_ref[...]                       # (3, T)  rows = [t, x, mask]
    t_c = pts_c[0:1, :]
    x_c = pts_c[1:2, :]
    mask_c = pts_c[2:3, :]

    pts_ib = pts_ib_ref[...]                     # (5, IB) rows = [t, x, u_target, mask_i, mask_b]
    t_ib = pts_ib[0:1, :]
    x_ib = pts_ib[1:2, :]
    u_tgt = pts_ib[2:3, :]
    mask_i = pts_ib[3:4, :]
    mask_b = pts_ib[4:5, :]

    wvec = wvec_ref[...]                         # (20, 8) columns
    w1_t = wvec[:, 0:1]                          # (20, 1) column of W1 acting on t
    w1_x = wvec[:, 1:2]                          # (20, 1) column of W1 acting on x
    b1 = wvec[:, 2:3]
    b2 = wvec[:, 3:4]
    b3 = wvec[:, 4:5]
    w4 = wvec[:, 5:6]                            # (20, 1) W4 as a column
    b4 = wvec[0:1, 6:7]                          # (1, 1) output bias
    # TODO(synk): b4 could be passed as an SMEM scalar (PrefetchScalarGridSpec) instead of a
    # broadcast wvec column; kept in the param slab since the cost is a single hoisted read.

    # ---------------- layer 1: affine + tanh, analytic d/dt, d/dx, d2/dx2 -------------
    y1 = w1_t * t_c + w1_x * x_c + b1            # (20, T)
    a1 = jnp.tanh(y1)
    s1 = 1.0 - a1 * a1                           # sech^2
    w1x_sq = w1_x * w1_x                         # hoisted (20, 1) constant
    buf_ref[:, 0:T] = a1                                               # collocation values
    buf_ref[:, T:n_val] = jnp.tanh(w1_t * t_ib + w1_x * x_ib + b1)     # IC/BC values
    buf_ref[:, n_val:n_val + T] = s1 * w1_t                            # d/dt
    buf_ref[:, n_val + T:n_val + 2 * T] = s1 * w1_x                    # d/dx
    buf_ref[:, n_val + 2 * T:n_val + 3 * T] = (-2.0 * a1) * (s1 * w1x_sq)  # d2/dx2 (y1_xx == 0)

    # ---------------- hidden layers 2 & 3: one merged MXU dot per layer ----------------
    for li, b in ((0, b2), (1, b3)):
        z = jnp.dot(wmat_ref[li], buf_ref[...],                        # (20, 4T + IB)
                    preferred_element_type=jnp.float32)
        vals = jnp.tanh(z[:, 0:n_val] + b)                             # collocation + IC/BC values
        a = vals[:, 0:T]
        s = 1.0 - a * a
        y_t = z[:, n_val:n_val + T]
        y_x = z[:, n_val + T:n_val + 2 * T]
        y_xx = z[:, n_val + 2 * T:n_val + 3 * T]
        buf_ref[:, 0:n_val] = vals
        buf_ref[:, n_val:n_val + T] = s * y_t
        buf_ref[:, n_val + T:n_val + 2 * T] = s * y_x
        buf_ref[:, n_val + 2 * T:n_val + 3 * T] = s * (y_xx - 2.0 * a * (y_x * y_x))

    # ---------------- layer 4: sublane multiply + reduce over the 20 hidden rows -------
    z4 = jnp.sum(w4 * buf_ref[...], axis=0, keepdims=True)             # (1, 4T + IB) lane-dense
    u = z4[:, 0:T] + b4
    u_ib = z4[:, T:n_val] + b4
    u_t = z4[:, n_val:n_val + T]
    u_x = z4[:, n_val + T:n_val + 2 * T]
    u_xx = z4[:, n_val + 2 * T:n_val + 3 * T]

    # PDE residual + data terms (masked partial sums; normalization done in the wrapper)
    f = u_t + u * u_x - NU * u_xx                                      # (1, T)
    pde_p = jnp.sum(mask_c * (f * f))

    d_ib = u_ib - u_tgt
    d2 = d_ib * d_ib
    is_first = jnp.where(pl.program_id(0) == 0, 1.0, 0.0)              # IC/BC counted once
    ic_p = is_first * jnp.sum(mask_i * d2)
    bc_p = is_first * jnp.sum(mask_b * d2)

    lane = jax.lax.broadcasted_iota(jnp.int32, (1, 8, 128), 2)
    out_ref[...] = (jnp.where(lane == 0, pde_p, 0.0)
                    + jnp.where(lane == 1, ic_p, 0.0)
                    + jnp.where(lane == 2, bc_p, 0.0))                 # lane-dense (1,8,128) store


def _round_up(n, m):
    return ((n + m - 1) // m) * m


def burgers_pinn_loss(params, t_c, x_c, t_i, x_i, u_i, t_b, x_b, u_b):
    w1, b1, w2, b2, w3, b3, w4, b4 = params
    n_c, n_i, n_b = t_c.shape[0], t_i.shape[0], t_b.shape[0]

    # Lane-aligned padded sizes (all multiples of 128).
    tile_n = min(512, _round_up(n_c, 128))
    n_c_pad = _round_up(n_c, tile_n)
    num_blocks = n_c_pad // tile_n
    n_ib = n_i + n_b
    ib_pad = _round_up(max(n_ib, 1), 128)

    def pad_lane(v, n_pad):                      # (n, 1) column -> zero-padded (n_pad,) row
        return jnp.pad(v[:, 0].astype(jnp.float32), (0, n_pad - v.shape[0]))

    # Collocation points, (3, n_c_pad): [t; x; mask]
    mask_c = (jnp.arange(n_c_pad) < n_c).astype(jnp.float32)
    pts_c = jnp.stack([pad_lane(t_c, n_c_pad), pad_lane(x_c, n_c_pad), mask_c], axis=0)

    # Initial + boundary points, (5, ib_pad): [t; x; u_target; mask_initial; mask_boundary]
    t_ib = jnp.concatenate([t_i, t_b], axis=0)
    x_ib = jnp.concatenate([x_i, x_b], axis=0)
    u_ib = jnp.concatenate([u_i, u_b], axis=0)
    idx = jnp.arange(ib_pad)
    mask_i = (idx < n_i).astype(jnp.float32)
    mask_b = ((idx >= n_i) & (idx < n_ib)).astype(jnp.float32)
    pts_ib = jnp.stack([pad_lane(t_ib, ib_pad), pad_lane(x_ib, ib_pad),
                        pad_lane(u_ib, ib_pad), mask_i, mask_b], axis=0)

    # Square weights (used as W @ H in the transposed layout) and small vector params.
    wmat = jnp.stack([w2, w3], axis=0).astype(jnp.float32)             # (2, 20, 20)
    wvec = jnp.stack([
        w1[:, 0], w1[:, 1], b1, b2, b3, w4[0, :],
        jnp.full((HIDDEN,), b4[0], jnp.float32),
        jnp.zeros((HIDDEN,), jnp.float32),
    ], axis=1).astype(jnp.float32)                                     # (20, 8)

    kernel = functools.partial(burgers_pinn_kernel, tile_n=tile_n, ib_pad=ib_pad)
    out = pl.pallas_call(
        kernel,
        out_shape=jax.ShapeDtypeStruct((num_blocks, 8, 128), jnp.float32),
        grid_spec=pltpu.PrefetchScalarGridSpec(
            num_scalar_prefetch=0,
            grid=(num_blocks,),
            in_specs=[
                pl.BlockSpec((3, tile_n), lambda i: (0, i)),           # collocation tile
                pl.BlockSpec((5, ib_pad), lambda i: (0, 0)),           # IC/BC, VMEM-resident
                pl.BlockSpec((2, HIDDEN, HIDDEN), lambda i: (0, 0, 0)),
                pl.BlockSpec((HIDDEN, 8), lambda i: (0, 0)),
            ],
            out_specs=pl.BlockSpec((1, 8, 128), lambda i: (i, 0, 0)),  # per-block partial losses
            scratch_shapes=[pltpu.VMEM((HIDDEN, 4 * tile_n + ib_pad), jnp.float32)],
        ),
        compiler_params=pltpu.CompilerParams(dimension_semantics=("parallel",)),
    )(pts_c, pts_ib, wmat, wvec)

    # Final reduction + global normalization (per-block partials were un-normalized sums).
    return (jnp.sum(out[:, 0, 0]) / n_c
            + jnp.sum(out[:, 0, 1]) / n_i
            + jnp.sum(out[:, 0, 2]) / n_b)


# ----------------------- pure-JAX reference (autodiff) -----------------------
def _net_apply(params, tx):
    w1, b1, w2, b2, w3, b3, w4, b4 = params
    h = jnp.tanh(tx @ w1.T + b1)
    h = jnp.tanh(h @ w2.T + b2)
    h = jnp.tanh(h @ w3.T + b3)
    return h @ w4.T + b4


def reference_loss(params, t_c, x_c, t_i, x_i, u_i, t_b, x_b, u_b):
    def u_scalar(t, x):
        return _net_apply(params, jnp.stack([t, x])[None, :])[0, 0]

    u_t_fn = jax.grad(u_scalar, argnums=0)
    u_x_fn = jax.grad(u_scalar, argnums=1)
    u_xx_fn = jax.grad(u_x_fn, argnums=1)

    tc, xc = t_c[:, 0], x_c[:, 0]
    u = jax.vmap(u_scalar)(tc, xc)
    u_t = jax.vmap(u_t_fn)(tc, xc)
    u_x = jax.vmap(u_x_fn)(tc, xc)
    u_xx = jax.vmap(u_xx_fn)(tc, xc)
    f = u_t + u * u_x - NU * u_xx
    loss_f = jnp.mean(f ** 2)
    loss_i = jnp.mean((_net_apply(params, jnp.concatenate([t_i, x_i], 1)) - u_i) ** 2)
    loss_b = jnp.mean((_net_apply(params, jnp.concatenate([t_b, x_b], 1)) - u_b) ** 2)
    return loss_f + loss_i + loss_b


def init_params(key):
    """Deterministic init mimicking PyTorch Linear default U(-1/sqrt(fan_in), 1/sqrt(fan_in))."""
    dims = [(HIDDEN, 2), (HIDDEN, HIDDEN), (HIDDEN, HIDDEN), (1, HIDDEN)]
    params = []
    for out_d, in_d in dims:
        key, kw, kb = jax.random.split(key, 3)
        bound = 1.0 / math.sqrt(in_d)
        w = jax.random.uniform(kw, (out_d, in_d), jnp.float32, -bound, bound)
        b = jax.random.uniform(kb, (out_d,), jnp.float32, -bound, bound)
        params += [w, b]
    return tuple(params)


if __name__ == "__main__":
    key = jax.random.PRNGKey(0)
    kc1, kc2, ki1, ki2, ki3, kb1, kb2, kb3 = jax.random.split(key, 8)

    N_C, N_I, N_B = 64, 32, 32
    t_c = jax.random.uniform(kc1, (N_C, 1), jnp.float32, 0.0, 1.0)
    x_c = jax.random.uniform(kc2, (N_C, 1), jnp.float32, -1.0, 1.0)
    t_i = jnp.zeros((N_I, 1), jnp.float32)
    x_i = jax.random.uniform(ki1, (N_I, 1), jnp.float32, -1.0, 1.0)
    u_i = -jnp.sin(math.pi * x_i)
    t_b = jax.random.uniform(kb1, (N_B, 1), jnp.float32, 0.0, 1.0)
    x_b = jnp.where(jax.random.uniform(kb2, (N_B, 1)) > 0.5, 1.0, -1.0).astype(jnp.float32)
    u_b = jnp.zeros((N_B, 1), jnp.float32)

    params = init_params(jax.random.PRNGKey(42))

    loss = burgers_pinn_loss(params, t_c, x_c, t_i, x_i, u_i, t_b, x_b, u_b)
    loss = jax.block_until_ready(loss)

    ref = jax.block_until_ready(
        reference_loss(params, t_c, x_c, t_i, x_i, u_i, t_b, x_b, u_b)
    )
    assert jnp.isfinite(loss), "non-finite loss"
    assert abs(float(loss) - float(ref)) <= 1e-3 * abs(float(ref)) + 1e-4, (
        f"mismatch: pallas={float(loss)} ref={float(ref)}"
    )
    print("KERNEL_OK")
</pallas_src>

<mosaic_0001>
module attributes {stable_mosaic.version = 11 : i64} {
  func.func @burgers_pinn_kernel(%arg0: i32, %arg1: memref<3x128xf32, #tpu.memory_space<vmem>>, %arg2: memref<5x128xf32, #tpu.memory_space<vmem>>, %arg3: memref<2x20x20xf32, #tpu.memory_space<vmem>>, %arg4: memref<20x8xf32, #tpu.memory_space<vmem>>, %arg5: memref<1x8x128xf32, #tpu.memory_space<vmem>>, %arg6: memref<20x640xf32, #tpu.memory_space<vmem>>) attributes {dimension_semantics = [#tpu.dimension_semantics<parallel>], iteration_bounds = array<i64: 1>, scalar_prefetch = 0 : i64, scratch_operands = 1 : i64, tpu.core_type = #tpu.core_type<tc>, window_params = [{transform_indices = @transform_0, window_bounds = array<i64: 3, 128>}, {pipeline_mode = #tpu.pipeline_mode<synchronous>, transform_indices = @transform_1, window_bounds = array<i64: 5, 128>}, {pipeline_mode = #tpu.pipeline_mode<synchronous>, transform_indices = @transform_2, window_bounds = array<i64: 2, 20, 20>}, {pipeline_mode = #tpu.pipeline_mode<synchronous>, transform_indices = @transform_3, window_bounds = array<i64: 20, 8>}, {transform_indices = @transform_4, window_bounds = array<i64: 1, 8, 128>}]} {
    %c0 = arith.constant 0 : index
    %c0_0 = arith.constant 0 : index
    %0 = vector.load %arg1[%c0, %c0_0] : memref<3x128xf32, #tpu.memory_space<vmem>>, vector<3x128xf32>
    %1 = vector.extract_strided_slice %0 {offsets = [0, 0], sizes = [1, 128], strides = [1, 1]} : vector<3x128xf32> to vector<1x128xf32>
    %2 = vector.extract_strided_slice %0 {offsets = [1, 0], sizes = [1, 128], strides = [1, 1]} : vector<3x128xf32> to vector<1x128xf32>
    %3 = vector.extract_strided_slice %0 {offsets = [2, 0], sizes = [1, 128], strides = [1, 1]} : vector<3x128xf32> to vector<1x128xf32>
    %c0_1 = arith.constant 0 : index
    %c0_2 = arith.constant 0 : index
    %4 = vector.load %arg2[%c0_1, %c0_2] : memref<5x128xf32, #tpu.memory_space<vmem>>, vector<5x128xf32>
    %5 = vector.extract_strided_slice %4 {offsets = [0, 0], sizes = [1, 128], strides = [1, 1]} : vector<5x128xf32> to vector<1x128xf32>
    %6 = vector.extract_strided_slice %4 {offsets = [1, 0], sizes = [1, 128], strides = [1, 1]} : vector<5x128xf32> to vector<1x128xf32>
    %7 = vector.extract_strided_slice %4 {offsets = [2, 0], sizes = [1, 128], strides = [1, 1]} : vector<5x128xf32> to vector<1x128xf32>
    %8 = vector.extract_strided_slice %4 {offsets = [3, 0], sizes = [1, 128], strides = [1, 1]} : vector<5x128xf32> to vector<1x128xf32>
    %9 = vector.extract_strided_slice %4 {offsets = [4, 0], sizes = [1, 128], strides = [1, 1]} : vector<5x128xf32> to vector<1x128xf32>
    %c0_3 = arith.constant 0 : index
    %c0_4 = arith.constant 0 : index
    %10 = vector.load %arg4[%c0_3, %c0_4] : memref<20x8xf32, #tpu.memory_space<vmem>>, vector<20x8xf32>
    %11 = vector.extract_strided_slice %10 {offsets = [0, 0], sizes = [20, 1], strides = [1, 1]} : vector<20x8xf32> to vector<20x1xf32>
    %12 = vector.extract_strided_slice %10 {offsets = [0, 1], sizes = [20, 1], strides = [1, 1]} : vector<20x8xf32> to vector<20x1xf32>
    %13 = vector.extract_strided_slice %10 {offsets = [0, 2], sizes = [20, 1], strides = [1, 1]} : vector<20x8xf32> to vector<20x1xf32>
    %14 = vector.extract_strided_slice %10 {offsets = [0, 3], sizes = [20, 1], strides = [1, 1]} : vector<20x8xf32> to vector<20x1xf32>
    %15 = vector.extract_strided_slice %10 {offsets = [0, 4], sizes = [20, 1], strides = [1, 1]} : vector<20x8xf32> to vector<20x1xf32>
    %16 = vector.extract_strided_slice %10 {offsets = [0, 5], sizes = [20, 1], strides = [1, 1]} : vector<20x8xf32> to vector<20x1xf32>
    %17 = vector.extract_strided_slice %10 {offsets = [0, 6], sizes = [1, 1], strides = [1, 1]} : vector<20x8xf32> to vector<1x1xf32>
    %18 = vector.broadcast %11 : vector<20x1xf32> to vector<20x128xf32>
    %19 = vector.broadcast %1 : vector<1x128xf32> to vector<20x128xf32>
    %20 = arith.mulf %18, %19 : vector<20x128xf32>
    %21 = vector.broadcast %12 : vector<20x1xf32> to vector<20x128xf32>
    %22 = vector.broadcast %2 : vector<1x128xf32> to vector<20x128xf32>
    %23 = arith.mulf %21, %22 : vector<20x128xf32>
    %24 = arith.addf %20, %23 : vector<20x128xf32>
    %25 = vector.broadcast %13 : vector<20x1xf32> to vector<20x128xf32>
    %26 = arith.addf %24, %25 : vector<20x128xf32>
    %27 = math.tanh %26 : vector<20x128xf32>
    %28 = arith.mulf %27, %27 : vector<20x128xf32>
    %cst = arith.constant 1.000000e+00 : f32
    %29 = vector.broadcast %cst : f32 to vector<20x128xf32>
    %30 = arith.subf %29, %28 : vector<20x128xf32>
    %31 = arith.mulf %12, %12 : vector<20x1xf32>
    %c0_5 = arith.constant 0 : index
    %c0_6 = arith.constant 0 : index
    %32 = vector.load %arg6[%c0_5, %c0_6] : memref<20x640xf32, #tpu.memory_space<vmem>>, vector<20x128xf32>
    tpu.vector_store %arg6[%c0_5, %c0_6], %27 {strides = array<i32>} : memref<20x640xf32, #tpu.memory_space<vmem>>, vector<20x128xf32>,
    %33 = vector.broadcast %11 : vector<20x1xf32> to vector<20x128xf32>
    %34 = vector.broadcast %5 : vector<1x128xf32> to vector<20x128xf32>
    %35 = arith.mulf %33, %34 : vector<20x128xf32>
    %36 = vector.broadcast %12 : vector<20x1xf32> to vector<20x128xf32>
    %37 = vector.broadcast %6 : vector<1x128xf32> to vector<20x128xf32>
    %38 = arith.mulf %36, %37 : vector<20x128xf32>
    %39 = arith.addf %35, %38 : vector<20x128xf32>
    %40 = vector.broadcast %13 : vector<20x1xf32> to vector<20x128xf32>
    %41 = arith.addf %39, %40 : vector<20x128xf32>
    %42 = math.tanh %41 : vector<20x128xf32>
    %c0_7 = arith.constant 0 : index
    %c128 = arith.constant 128 : index
    %43 = vector.load %arg6[%c0_7, %c128] : memref<20x640xf32, #tpu.memory_space<vmem>>, vector<20x128xf32>
    tpu.vector_store %arg6[%c0_7, %c128], %42 {strides = array<i32>} : memref<20x640xf32, #tpu.memory_space<vmem>>, vector<20x128xf32>,
    %44 = vector.broadcast %11 : vector<20x1xf32> to vector<20x128xf32>
    %45 = arith.mulf %30, %44 : vector<20x128xf32>
    %c0_8 = arith.constant 0 : index
    %c256 = arith.constant 256 : index
    %46 = vector.load %arg6[%c0_8, %c256] : memref<20x640xf32, #tpu.memory_space<vmem>>, vector<20x128xf32>
    tpu.vector_store %arg6[%c0_8, %c256], %45 {strides = array<i32>} : memref<20x640xf32, #tpu.memory_space<vmem>>, vector<20x128xf32>,
    %47 = vector.broadcast %12 : vector<20x1xf32> to vector<20x128xf32>
    %48 = arith.mulf %30, %47 : vector<20x128xf32>
    %c0_9 = arith.constant 0 : index
    %c384 = arith.constant 384 : index
    %49 = vector.load %arg6[%c0_9, %c384] : memref<20x640xf32, #tpu.memory_space<vmem>>, vector<20x128xf32>
    tpu.vector_store %arg6[%c0_9, %c384], %48 {strides = array<i32>} : memref<20x640xf32, #tpu.memory_space<vmem>>, vector<20x128xf32>,
    %cst_10 = arith.constant -2.000000e+00 : f32
    %50 = vector.broadcast %cst_10 : f32 to vector<20x128xf32>
    %51 = arith.mulf %50, %27 : vector<20x128xf32>
    %52 = vector.broadcast %31 : vector<20x1xf32> to vector<20x128xf32>
    %53 = arith.mulf %30, %52 : vector<20x128xf32>
    %54 = arith.mulf %51, %53 : vector<20x128xf32>
    %c0_11 = arith.constant 0 : index
    %c512 = arith.constant 512 : index
    %55 = vector.load %arg6[%c0_11, %c512] : memref<20x640xf32, #tpu.memory_space<vmem>>, vector<20x128xf32>
    tpu.vector_store %arg6[%c0_11, %c512], %54 {strides = array<i32>} : memref<20x640xf32, #tpu.memory_space<vmem>>, vector<20x128xf32>,
    %c0_12 = arith.constant 0 : index
    %c0_13 = arith.constant 0 : index
    %c0_14 = arith.constant 0 : index
    %56 = vector.load %arg3[%c0_12, %c0_13, %c0_14] : memref<2x20x20xf32, #tpu.memory_space<vmem>>, vector<1x20x20xf32>
    %57 = vector.shape_cast %56 : vector<1x20x20xf32> to vector<20x20xf32>
    %c0_15 = arith.constant 0 : index
    %c0_16 = arith.constant 0 : index
    %58 = vector.load %arg6[%c0_15, %c0_16] : memref<20x640xf32, #tpu.memory_space<vmem>>, vector<20x640xf32>
    %cst_17 = arith.constant dense<0.000000e+00> : vector<20x640xf32>
    %59 = tpu.matmul %57, %58, %cst_17 {dimension_numbers = #tpu.dot_dimension_numbers<[1], [0], [0], [1], [0, 0, 1, 1], [], []>} : vector<20x20xf32>, vector<20x640xf32>, vector<20x640xf32> -> vector<20x640xf32>
    %60 = vector.extract_strided_slice %59 {offsets = [0, 0], sizes = [20, 256], strides = [1, 1]} : vector<20x640xf32> to vector<20x256xf32>
    %61 = vector.broadcast %14 : vector<20x1xf32> to vector<20x256xf32>
    %62 = arith.addf %60, %61 : vector<20x256xf32>
    %63 = math.tanh %62 : vector<20x256xf32>
    %64 = vector.extract_strided_slice %63 {offsets = [0, 0], sizes = [20, 128], strides = [1, 1]} : vector<20x256xf32> to vector<20x128xf32>
    %65 = arith.mulf %64, %64 : vector<20x128xf32>
    %cst_18 = arith.constant 1.000000e+00 : f32
    %66 = vector.broadcast %cst_18 : f32 to vector<20x128xf32>
    %67 = arith.subf %66, %65 : vector<20x128xf32>
    %68 = vector.extract_strided_slice %59 {offsets = [0, 256], sizes = [20, 128], strides = [1, 1]} : vector<20x640xf32> to vector<20x128xf32>
    %69 = vector.extract_strided_slice %59 {offsets = [0, 384], sizes = [20, 128], strides = [1, 1]} : vector<20x640xf32> to vector<20x128xf32>
    %70 = vector.extract_strided_slice %59 {offsets = [0, 512], sizes = [20, 128], strides = [1, 1]} : vector<20x640xf32> to vector<20x128xf32>
    %c0_19 = arith.constant 0 : index
    %c0_20 = arith.constant 0 : index
    %71 = vector.load %arg6[%c0_19, %c0_20] : memref<20x640xf32, #tpu.memory_space<vmem>>, vector<20x256xf32>
    tpu.vector_store %arg6[%c0_19, %c0_20], %63 {strides = array<i32>} : memref<20x640xf32, #tpu.memory_space<vmem>>, vector<20x256xf32>,
    %72 = arith.mulf %67, %68 : vector<20x128xf32>
    %c0_21 = arith.constant 0 : index
    %c256_22 = arith.constant 256 : index
    %73 = vector.load %arg6[%c0_21, %c256_22] : memref<20x640xf32, #tpu.memory_space<vmem>>, vector<20x128xf32>
    tpu.vector_store %arg6[%c0_21, %c256_22], %72 {strides = array<i32>} : memref<20x640xf32, #tpu.memory_space<vmem>>, vector<20x128xf32>,
    %74 = arith.mulf %67, %69 : vector<20x128xf32>
    %c0_23 = arith.constant 0 : index
    %c384_24 = arith.constant 384 : index
    %75 = vector.load %arg6[%c0_23, %c384_24] : memref<20x640xf32, #tpu.memory_space<vmem>>, vector<20x128xf32>
    tpu.vector_store %arg6[%c0_23, %c384_24], %74 {strides = array<i32>} : memref<20x640xf32, #tpu.memory_space<vmem>>, vector<20x128xf32>,
    %cst_25 = arith.constant 2.000000e+00 : f32
    %76 = vector.broadcast %cst_25 : f32 to vector<20x128xf32>
    %77 = arith.mulf %76, %64 : vector<20x128xf32>
    %78 = arith.mulf %69, %69 : vector<20x128xf32>
    %79 = arith.mulf %77, %78 : vector<20x128xf32>
    %80 = arith.subf %70, %79 : vector<20x128xf32>
    %81 = arith.mulf %67, %80 : vector<20x128xf32>
    %c0_26 = arith.constant 0 : index
    %c512_27 = arith.constant 512 : index
    %82 = vector.load %arg6[%c0_26, %c512_27] : memref<20x640xf32, #tpu.memory_space<vmem>>, vector<20x128xf32>
    tpu.vector_store %arg6[%c0_26, %c512_27], %81 {strides = array<i32>} : memref<20x640xf32, #tpu.memory_space<vmem>>, vector<20x128xf32>,
    %c1 = arith.constant 1 : index
    %c0_28 = arith.constant 0 : index
    %c0_29 = arith.constant 0 : index
    %83 = vector.load %arg3[%c1, %c0_28, %c0_29] : memref<2x20x20xf32, #tpu.memory_space<vmem>>, vector<1x20x20xf32>
    %84 = vector.shape_cast %83 : vector<1x20x20xf32> to vector<20x20xf32>
    %c0_30 = arith.constant 0 : index
    %c0_31 = arith.constant 0 : index
    %85 = vector.load %arg6[%c0_30, %c0_31] : memref<20x640xf32, #tpu.memory_space<vmem>>, vector<20x640xf32>
    %cst_32 = arith.constant dense<0.000000e+00> : vector<20x640xf32>
    %86 = tpu.matmul %84, %85, %cst_32 {dimension_numbers = #tpu.dot_dimension_numbers<[1], [0], [0], [1], [0, 0, 1, 1], [], []>} : vector<20x20xf32>, vector<20x640xf32>, vector<20x640xf32> -> vector<20x640xf32>
    %87 = vector.extract_strided_slice %86 {offsets = [0, 0], sizes = [20, 256], strides = [1, 1]} : vector<20x640xf32> to vector<20x256xf32>
    %88 = vector.broadcast %15 : vector<20x1xf32> to vector<20x256xf32>
    %89 = arith.addf %87, %88 : vector<20x256xf32>
    %90 = math.tanh %89 : vector<20x256xf32>
    %91 = vector.extract_strided_slice %90 {offsets = [0, 0], sizes = [20, 128], strides = [1, 1]} : vector<20x256xf32> to vector<20x128xf32>
    %92 = arith.mulf %91, %91 : vector<20x128xf32>
    %cst_33 = arith.constant 1.000000e+00 : f32
    %93 = vector.broadcast %cst_33 : f32 to vector<20x128xf32>
    %94 = arith.subf %93, %92 : vector<20x128xf32>
    %95 = vector.extract_strided_slice %86 {offsets = [0, 256], sizes = [20, 128], strides = [1, 1]} : vector<20x640xf32> to vector<20x128xf32>
    %96 = vector.extract_strided_slice %86 {offsets = [0, 384], sizes = [20, 128], strides = [1, 1]} : vector<20x640xf32> to vector<20x128xf32>
    %97 = vector.extract_strided_slice %86 {offsets = [0, 512], sizes = [20, 128], strides = [1, 1]} : vector<20x640xf32> to vector<20x128xf32>
    %c0_34 = arith.constant 0 : index
    %c0_35 = arith.constant 0 : index
    %98 = vector.load %arg6[%c0_34, %c0_35] : memref<20x640xf32, #tpu.memory_space<vmem>>, vector<20x256xf32>
    tpu.vector_store %arg6[%c0_34, %c0_35], %90 {strides = array<i32>} : memref<20x640xf32, #tpu.memory_space<vmem>>, vector<20x256xf32>,
    %99 = arith.mulf %94, %95 : vector<20x128xf32>
    %c0_36 = arith.constant 0 : index
    %c256_37 = arith.constant 256 : index
    %100 = vector.load %arg6[%c0_36, %c256_37] : memref<20x640xf32, #tpu.memory_space<vmem>>, vector<20x128xf32>
    tpu.vector_store %arg6[%c0_36, %c256_37], %99 {strides = array<i32>} : memref<20x640xf32, #tpu.memory_space<vmem>>, vector<20x128xf32>,
    %101 = arith.mulf %94, %96 : vector<20x128xf32>
    %c0_38 = arith.constant 0 : index
    %c384_39 = arith.constant 384 : index
    %102 = vector.load %arg6[%c0_38, %c384_39] : memref<20x640xf32, #tpu.memory_space<vmem>>, vector<20x128xf32>
    tpu.vector_store %arg6[%c0_38, %c384_39], %101 {strides = array<i32>} : memref<20x640xf32, #tpu.memory_space<vmem>>, vector<20x128xf32>,
    %cst_40 = arith.constant 2.000000e+00 : f32
    %103 = vector.broadcast %cst_40 : f32 to vector<20x128xf32>
    %104 = arith.mulf %103, %91 : vector<20x128xf32>
    %105 = arith.mulf %96, %96 : vector<20x128xf32>
    %106 = arith.mulf %104, %105 : vector<20x128xf32>
    %107 = arith.subf %97, %106 : vector<20x128xf32>
    %108 = arith.mulf %94, %107 : vector<20x128xf32>
    %c0_41 = arith.constant 0 : index
    %c512_42 = arith.constant 512 : index
    %109 = vector.load %arg6[%c0_41, %c512_42] : memref<20x640xf32, #tpu.memory_space<vmem>>, vector<20x128xf32>
    tpu.vector_store %arg6[%c0_41, %c512_42], %108 {strides = array<i32>} : memref<20x640xf32, #tpu.memory_space<vmem>>, vector<20x128xf32>,
    %c0_43 = arith.constant 0 : index
    %c0_44 = arith.constant 0 : index
    %110 = vector.load %arg6[%c0_43, %c0_44] : memref<20x640xf32, #tpu.memory_space<vmem>>, vector<20x640xf32>
    %111 = vector.broadcast %16 : vector<20x1xf32> to vector<20x640xf32>
    %112 = arith.mulf %111, %110 : vector<20x640xf32>
    %cst_45 = arith.constant dense<0.000000e+00> : vector<640xf32>
    %113 = vector.multi_reduction <add>, %112, %cst_45 [0] : vector<20x640xf32> to vector<640xf32>
    %114 = vector.shape_cast %113 : vector<640xf32> to vector<1x640xf32>
    %115 = vector.extract_strided_slice %114 {offsets = [0, 0], sizes = [1, 128], strides = [1, 1]} : vector<1x640xf32> to vector<1x128xf32>
    %116 = vector.broadcast %17 : vector<1x1xf32> to vector<1x128xf32>
    %117 = arith.addf %115, %116 : vector<1x128xf32>
    %118 = vector.extract_strided_slice %114 {offsets = [0, 128], sizes = [1, 128], strides = [1, 1]} : vector<1x640xf32> to vector<1x128xf32>
    %119 = vector.broadcast %17 : vector<1x1xf32> to vector<1x128xf32>
    %120 = arith.addf %118, %119 : vector<1x128xf32>
    %121 = vector.extract_strided_slice %114 {offsets = [0, 256], sizes = [1, 128], strides = [1, 1]} : vector<1x640xf32> to vector<1x128xf32>
    %122 = vector.extract_strided_slice %114 {offsets = [0, 384], sizes = [1, 128], strides = [1, 1]} : vector<1x640xf32> to vector<1x128xf32>
    %123 = vector.extract_strided_slice %114 {offsets = [0, 512], sizes = [1, 128], strides = [1, 1]} : vector<1x640xf32> to vector<1x128xf32>
    %124 = arith.mulf %117, %122 : vector<1x128xf32>
    %125 = arith.addf %121, %124 : vector<1x128xf32>
    %cst_46 = arith.constant 0.00318309898 : f32
    %126 = vector.broadcast %cst_46 : f32 to vector<1x128xf32>
    %127 = arith.mulf %126, %123 : vector<1x128xf32>
    %128 = arith.subf %125, %127 : vector<1x128xf32>
    %129 = arith.mulf %128, %128 : vector<1x128xf32>
    %130 = arith.mulf %3, %129 : vector<1x128xf32>
    %131 = vector.shape_cast %130 : vector<1x128xf32> to vector<1x1x128xf32>
    %cst_47 = arith.constant dense<0.000000e+00> : vector<1xf32>
    %132 = vector.multi_reduction <add>, %131, %cst_47 [1, 2] : vector<1x1x128xf32> to vector<1xf32>
    %133 = vector.shape_cast %132 : vector<1xf32> to vector<1x1x1xf32>
    %134 = vector.extract %133[0, 0, 0] : f32 from vector<1x1x1xf32>
    %135 = arith.subf %120, %7 : vector<1x128xf32>
    %136 = arith.mulf %135, %135 : vector<1x128xf32>
    %c0_i32 = arith.constant 0 : i32
    %137 = arith.cmpi eq, %arg0, %c0_i32 : i32
    %cst_48 = arith.constant 1.000000e+00 : f32
    %cst_49 = arith.constant 0.000000e+00 : f32
    %138 = arith.select %137, %cst_48, %cst_49 : f32
    %139 = arith.mulf %8, %136 : vector<1x128xf32>
    %140 = vector.shape_cast %139 : vector<1x128xf32> to vector<1x1x128xf32>
    %cst_50 = arith.constant dense<0.000000e+00> : vector<1xf32>
    %141 = vector.multi_reduction <add>, %140, %cst_50 [1, 2] : vector<1x1x128xf32> to vector<1xf32>
    %142 = vector.shape_cast %141 : vector<1xf32> to vector<1x1x1xf32>
    %143 = vector.extract %142[0, 0, 0] : f32 from vector<1x1x1xf32>
    %144 = arith.mulf %138, %143 : f32
    %145 = arith.mulf %9, %136 : vector<1x128xf32>
    %146 = vector.shape_cast %145 : vector<1x128xf32> to vector<1x1x128xf32>
    %cst_51 = arith.constant dense<0.000000e+00> : vector<1xf32>
    %147 = vector.multi_reduction <add>, %146, %cst_51 [1, 2] : vector<1x1x128xf32> to vector<1xf32>
    %148 = vector.shape_cast %147 : vector<1xf32> to vector<1x1x1xf32>
    %149 = vector.extract %148[0, 0, 0] : f32 from vector<1x1x1xf32>
    %150 = arith.mulf %138, %149 : f32
    %151 = tpu.iota {dimensions = array<i32: 2>} : vector<1x8x128xi32>
    %c0_i32_52 = arith.constant 0 : i32
    %152 = vector.broadcast %c0_i32_52 : i32 to vector<1x8x128xi32>
    %153 = arith.cmpi eq, %151, %152 : vector<1x8x128xi32>
    %cst_53 = arith.constant 0.000000e+00 : f32
    %154 = vector.broadcast %134 : f32 to vector<1x8x128xf32>
    %155 = vector.broadcast %cst_53 : f32 to vector<1x8x128xf32>
    %156 = arith.select %153, %154, %155 : vector<1x8x128xi1>, vector<1x8x128xf32>
    %c1_i32 = arith.constant 1 : i32
    %157 = vector.broadcast %c1_i32 : i32 to vector<1x8x128xi32>
    %158 = arith.cmpi eq, %151, %157 : vector<1x8x128xi32>
    %cst_54 = arith.constant 0.000000e+00 : f32
    %159 = vector.broadcast %144 : f32 to vector<1x8x128xf32>
    %160 = vector.broadcast %cst_54 : f32 to vector<1x8x128xf32>
    %161 = arith.select %158, %159, %160 : vector<1x8x128xi1>, vector<1x8x128xf32>
    %162 = arith.addf %156, %161 : vector<1x8x128xf32>
    %c2_i32 = arith.constant 2 : i32
    %163 = vector.broadcast %c2_i32 : i32 to vector<1x8x128xi32>
    %164 = arith.cmpi eq, %151, %163 : vector<1x8x128xi32>
    %cst_55 = arith.constant 0.000000e+00 : f32
    %165 = vector.broadcast %150 : f32 to vector<1x8x128xf32>
    %166 = vector.broadcast %cst_55 : f32 to vector<1x8x128xf32>
    %167 = arith.select %164, %165, %166 : vector<1x8x128xi1>, vector<1x8x128xf32>
    %168 = arith.addf %162, %167 : vector<1x8x128xf32>
    %c0_56 = arith.constant 0 : index
    %c0_57 = arith.constant 0 : index
    %c0_58 = arith.constant 0 : index
    %169 = vector.load %arg5[%c0_56, %c0_57, %c0_58] : memref<1x8x128xf32, #tpu.memory_space<vmem>>, vector<1x8x128xf32>
    tpu.vector_store %arg5[%c0_56, %c0_57, %c0_58], %168 {strides = array<i32>} : memref<1x8x128xf32, #tpu.memory_space<vmem>>, vector<1x8x128xf32>,
    return
  }
  func.func @transform_0(%arg0: i32) -> (i32, i32) {
    %c0_i32 = arith.constant 0 : i32
    %c0_i32_0 = arith.constant 0 : i32
    return %c0_i32, %arg0 : i32, i32
  }
  func.func @transform_1(%arg0: i32) -> (i32, i32) {
    %c0_i32 = arith.constant 0 : i32
    %c0_i32_0 = arith.constant 0 : i32
    %c0_i32_1 = arith.constant 0 : i32
    return %c0_i32, %c0_i32_0 : i32, i32
  }
  func.func @transform_2(%arg0: i32) -> (i32, i32, i32) {
    %c0_i32 = arith.constant 0 : i32
    %c0_i32_0 = arith.constant 0 : i32
    %c0_i32_1 = arith.constant 0 : i32
    %c0_i32_2 = arith.constant 0 : i32
    return %c0_i32, %c0_i32_0, %c0_i32_1 : i32, i32, i32
  }
  func.func @transform_3(%arg0: i32) -> (i32, i32) {
    %c0_i32 = arith.constant 0 : i32
    %c0_i32_0 = arith.constant 0 : i32
    %c0_i32_1 = arith.constant 0 : i32
    return %c0_i32, %c0_i32_0 : i32, i32
  }
  func.func @transform_4(%arg0: i32) -> (i32, i32, i32) {
    %c0_i32 = arith.constant 0 : i32
    %c0_i32_0 = arith.constant 0 : i32
    %c0_i32_1 = arith.constant 0 : i32
    return %arg0, %c0_i32, %c0_i32_0 : i32, i32, i32
  }
}

</mosaic_0001>

<llo_original>
// kernel: tpu_custom_call.1
$region0: #{tpu_custom_call.1}
  #allocation0 [shape = 'u32[]', space=smem, size = 0x4, offset = 0x4, fixed_abs, tag = 'smem constant byte address 0x4 - core index']
  #allocation1 [shape = 'u32[144,128]{1,0:T(1,128)}', space=vmem, size = 0x12000, scoped, tag = 'internal scratch']
  #allocation2 [shape = 'f32[20,640]{1,0:T(8,128)}', space=vmem, size = 0xf000, scoped, tag = 'scratch operand']
  %s0 = inlined_call_operand.vmem [shape: f32[3,128], index: 0, kind: input, shape index: {}]
  %s1 = inlined_call_operand.vmem [shape: f32[5,128], index: 1, kind: input, shape index: {}]
  %s2 = inlined_call_operand.vmem [shape: f32[2,20,20], index: 2, kind: input, shape index: {}]
  %s3 = inlined_call_operand.vmem [shape: f32[20,8], index: 3, kind: input, shape index: {}]
  %s4 = inlined_call_operand.hbm [shape: f32[1,8,128], index: 4, kind: output, shape index: {}]
  %s5 = sld [smem:[#allocation0]]
  $region26: #{tpu_custom_call.1} parent=0
    _
  %s7 = ssub.s32 1, %s5
  %s8 = scalar_select 0, %s7, %s5
  $region1: #{tpu_custom_call.1} parent=0
    #allocation3 [shape = 'u8[4096]{0}', space=vmem, size = 0x1000, scoped, tag = 'output window, operand 0, single buffered']
    #allocation4 [shape = 's32[1]{0}', space=sflag, size = 0x4, scoped, tag = 'scoped memory for tpu_custom_call.1']
    %9 = vsyncpa [#allocation4], 0
    // Predicated region
    $region2: #{tpu_custom_call.1} parent=1 // pred_check
      _
    $region3: #{tpu_custom_call.1} parent=1 // pred_check_branch
      %11 = sbr.rel (0) target = $region5
    $region4: #{tpu_custom_call.1} parent=1 // pred_region
      _
    $region5: #{tpu_custom_call.1} parent=1 // pred_fallthru
      _
    // Predicated region
    $region6: #{tpu_custom_call.1} parent=1 // pred_check
      _
    $region7: #{tpu_custom_call.1} parent=1 // pred_check_branch
      %13 = sbr.rel (0) target = $region9
    $region8: #{tpu_custom_call.1} parent=1 // pred_region
      _
    $region9: #{tpu_custom_call.1} parent=1 // pred_fallthru
      _
    // Predicated region
    $region10: #{tpu_custom_call.1} parent=1 // pred_check
      _
    $region11: #{tpu_custom_call.1} parent=1 // pred_check_branch
      %15 = sbr.rel (0) target = $region13
    $region12: #{tpu_custom_call.1} parent=1 // pred_region
      _
    $region13: #{tpu_custom_call.1} parent=1 // pred_fallthru
      _
    // Predicated region
    $region14: #{tpu_custom_call.1} parent=1 // pred_check
      _
    $region15: #{tpu_custom_call.1} parent=1 // pred_check_branch
      %17 = sbr.rel (0) target = $region17
    $region16: #{tpu_custom_call.1} parent=1 // pred_region
      _
    $region17: #{tpu_custom_call.1} parent=1 // pred_fallthru
      _
    %v18 = vld [vmem:[%s0] sm:$0x7]
    %v19 = vld [vmem:[%s1] sm:$0x1f]
    %v20 = vld [vmem:[%s3] sm:$0xff]
    %v21 = vld [vmem:[%s3 + $0x8] sm:$0xff]
    %v22 = vld [vmem:[%s3 + $0x10] sm:$0xf]
    %24 = vset.pattern.permute.xlu0 0
    %25 = vperm.xlu0 %24, %v20
    %v26 = vpop.permute.xlu0 %25
    %29 = vset.pattern.permute.xlu0 0
    %30 = vperm.xlu0 %29, %v21
    %v31 = vpop.permute.xlu0 %30
    %34 = vset.pattern.permute.xlu0 0
    %35 = vperm.xlu0 %34, %v22
    %v36 = vpop.permute.xlu0 %35
    %v38 = vlaneseq
    %v39 = vshrl.u32 %v38, 7
    %v40 = vsub.s32 0, %v39
    %v41 = vrot.slane %v18, %v40
    %v42 = vmul.f32 %v26, %v41
    %v43 = vmul.f32 %v31, %v41
    %v44 = vmul.f32 %v36, %v41
    %45 = vset.pattern.permute.xlu0 1
    %46 = vperm.xlu0 %45, %v20
    %v47 = vpop.permute.xlu0 %46
    %49 = vset.pattern.permute.xlu0 1
    %50 = vperm.xlu0 %49, %v21
    %v51 = vpop.permute.xlu0 %50
    %53 = vset.pattern.permute.xlu0 1
    %54 = vperm.xlu0 %53, %v22
    %v55 = vpop.permute.xlu0 %54
    %v57 = vlaneseq
    %v58 = vshrl.u32 %v57, 7
    %v59 = vsub.s32 1, %v58
    %v60 = vrot.slane %v18, %v59
    %v61 = vmul.f32 %v47, %v60
    %v62 = vmul.f32 %v51, %v60
    %v63 = vmul.f32 %v55, %v60
    %v64 = vadd.f32 %v42, %v61
    %v65 = vadd.f32 %v43, %v62
    %v66 = vadd.f32 %v44, %v63
    %67 = vset.pattern.permute.xlu0 2
    %68 = vperm.xlu0 %67, %v20
    %v69 = vpop.permute.xlu0 %68
    %71 = vset.pattern.permute.xlu0 2
    %72 = vperm.xlu0 %71, %v21
    %v73 = vpop.permute.xlu0 %72
    %75 = vset.pattern.permute.xlu0 2
    %76 = vperm.xlu0 %75, %v22
    %v77 = vpop.permute.xlu0 %76
    %v79 = vadd.f32 %v64, %v69
    %v80 = vadd.f32 %v65, %v73
    %v81 = vadd.f32 %v66, %v77
    %v82 = vtanh.pop %v79
    %v83 = vtanh.pop %v80
    %v84 = vtanh.pop %v81
    %v85 = vmul.f32 %v82, %v82
    %v86 = vmul.f32 %v83, %v83
    %v87 = vmul.f32 %v84, %v84
    %v88 = vsub.f32 1.0, %v85
    %v89 = vsub.f32 1.0, %v86
    %v90 = vsub.f32 1.0, %v87
    %v91 = vmul.f32 %v20, %v20
    %v92 = vmul.f32 %v21, %v21
    %v93 = vmul.f32 %v22, %v22
    %94 = vst [vmem:[#allocation2] sm:$0xff] %v82
    %95 = vst [vmem:[#allocation2 + $0x28] sm:$0xff] %v83
    %96 = vst [vmem:[#allocation2 + $0x50] sm:$0xf] %v84
    %v97 = vlaneseq
    %v98 = vshrl.u32 %v97, 7
    %v99 = vsub.s32 0, %v98
    %v100 = vrot.slane %v19, %v99
    %v101 = vmul.f32 %v26, %v100
    %v102 = vmul.f32 %v31, %v100
    %v103 = vmul.f32 %v36, %v100
    %v104 = vlaneseq
    %v105 = vshrl.u32 %v104, 7
    %v106 = vsub.s32 1, %v105
    %v107 = vrot.slane %v19, %v106
    %v108 = vmul.f32 %v47, %v107
    %v109 = vmul.f32 %v51, %v107
    %v110 = vmul.f32 %v55, %v107
    %v111 = vadd.f32 %v101, %v108
    %v112 = vadd.f32 %v102, %v109
    %v113 = vadd.f32 %v103, %v110
    %v114 = vadd.f32 %v111, %v69
    %v115 = vadd.f32 %v112, %v73
    %v116 = vadd.f32 %v113, %v77
    %v117 = vtanh.pop %v114
    %v118 = vtanh.pop %v115
    %v119 = vtanh.pop %v116
    %120 = vst [vmem:[#allocation2 + $0x8] sm:$0xff] %v117
    %121 = vst [vmem:[#allocation2 + $0x30] sm:$0xff] %v118
    %122 = vst [vmem:[#allocation2 + $0x58] sm:$0xf] %v119
    %v123 = vmul.f32 %v88, %v26
    %v124 = vmul.f32 %v89, %v31
    %v125 = vmul.f32 %v90, %v36
    %126 = vst [vmem:[#allocation2 + $0x10] sm:$0xff] %v123
    %127 = vst [vmem:[#allocation2 + $0x38] sm:$0xff] %v124
    %128 = vst [vmem:[#allocation2 + $0x60] sm:$0xf] %v125
    %v129 = vmul.f32 %v88, %v47
    %v130 = vmul.f32 %v89, %v51
    %v131 = vmul.f32 %v90, %v55
    %132 = vst [vmem:[#allocation2 + $0x18] sm:$0xff] %v129
    %133 = vst [vmem:[#allocation2 + $0x40] sm:$0xff] %v130
    %134 = vst [vmem:[#allocation2 + $0x68] sm:$0xf] %v131
    %v135 = vmul.f32 %v82, -2.0
    %v136 = vmul.f32 %v83, -2.0
    %v137 = vmul.f32 %v84, -2.0
    %139 = vset.pattern.permute.xlu0 1
    %140 = vperm.xlu0 %139, %v91
    %v141 = vpop.permute.xlu0 %140
    %144 = vset.pattern.permute.xlu0 1
    %145 = vperm.xlu0 %144, %v92
    %v146 = vpop.permute.xlu0 %145
    %149 = vset.pattern.permute.xlu0 1
    %150 = vperm.xlu0 %149, %v93
    %v151 = vpop.permute.xlu0 %150
    %v153 = vmul.f32 %v88, %v141
    %v154 = vmul.f32 %v89, %v146
    %v155 = vmul.f32 %v90, %v151
    %v156 = vmul.f32 %v135, %v153
    %v157 = vmul.f32 %v136, %v154
    %v158 = vmul.f32 %v137, %v155
    %159 = vst [vmem:[#allocation2 + $0x20] sm:$0xff] %v156
    %160 = vst [vmem:[#allocation2 + $0x48] sm:$0xff] %v157
    %161 = vst [vmem:[#allocation2 + $0x70] sm:$0xf] %v158
    %v162 = vld [vmem:[%s2] sm:$0xff]
    %v163 = vld [vmem:[%s2 + $0x8] sm:$0xff]
    %v164 = vld [vmem:[%s2 + $0x10] sm:$0xf]
    %v165 = vld [vmem:[#allocation2] sm:$0xff]
    %v166 = vld [vmem:[#allocation2 + $0x8] sm:$0xff]
    %v167 = vld [vmem:[#allocation2 + $0x10] sm:$0xff]
    %v168 = vld [vmem:[#allocation2 + $0x18] sm:$0xff]
    %v169 = vld [vmem:[#allocation2 + $0x20] sm:$0xff]
    %v170 = vld [vmem:[#allocation2 + $0x28] sm:$0xff]
    %v171 = vld [vmem:[#allocation2 + $0x30] sm:$0xff]
    %v172 = vld [vmem:[#allocation2 + $0x38] sm:$0xff]
    %v173 = vld [vmem:[#allocation2 + $0x40] sm:$0xff]
    %v174 = vld [vmem:[#allocation2 + $0x48] sm:$0xff]
    %v175 = vld [vmem:[#allocation2 + $0x50] sm:$0xf]
    %v176 = vld [vmem:[#allocation2 + $0x58] sm:$0xf]
    %v177 = vld [vmem:[#allocation2 + $0x60] sm:$0xf]
    %v178 = vld [vmem:[#allocation2 + $0x68] sm:$0xf]
    %v179 = vld [vmem:[#allocation2 + $0x70] sm:$0xf]
    %vm180 = vcmask 162816
    %v182 = vsel %vm180, %v162, 0
    %v185 = vsel %vm180, %v163, 0
    %v188 = vsel %vm180, %v164, 0
    %vm190 = vcmask 1043456
    %v192 = vsel %vm190, %v175, 0
    %v195 = vsel %vm190, %v176, 0
    %v198 = vsel %vm190, %v177, 0
    %v201 = vsel %vm190, %v178, 0
    %v204 = vsel %vm190, %v179, 0
    %206 = vmatprep.subr.mxu0 %v166
    %207 = vmatpush1.msra.mxu0 %v165
    %208 = vmatprep.subr.mxu0 %v171
    %209 = vmatpush1.msra.mxu0 %v170
    %210 = vmatprep.subr.mxu0 %v195
    %211 = vmatpush1.msra.mxu0 %v192
    %212 = vmatprep.subr.mxu0 0.0
    %213 = vmatpush1.msra.mxu0 0.0
    %214 = vmatprep.subr.mxu0 0.0
    %215 = vmatpush1.msra.mxu0 0.0
    %216 = vmatprep.subr.mxu0 0.0
    %217 = vmatpush1.msra.mxu0 0.0
    %218 = vmatprep.subr.mxu0 0.0
    %219 = vmatpush1.msra.mxu0 0.0
    %220 = vmatprep.subr.mxu0 0.0
    %221 = vmatpush1.msra.mxu0 0.0
    %222 = vmatprep.subr.mxu0 0.0
    %223 = vmatpush1.msra.mxu0 0.0
    %224 = vmatprep.subr.mxu0 0.0
    %225 = vmatpush1.msra.mxu0 0.0
    %226 = vmatprep.subr.mxu0 0.0
    %227 = vmatpush1.msra.mxu0 0.0
    %228 = vmatprep.subr.mxu0 0.0
    %229 = vmatpush1.msra.mxu0 0.0
    %230 = vmatprep.subr.mxu0 0.0
    %231 = vmatpush1.msra.mxu0 0.0
    %232 = vmatprep.subr.mxu0 0.0
    %233 = vmatpush1.msra.mxu0 0.0
    %234 = vmatprep.subr.mxu0 0.0
    %235 = vmatpush1.msra.mxu0 0.0
    %236 = vmatprep.subr.mxu0 0.0
    %237 = vmatpush1.msra.mxu0 0.0
    %238 = vmatprep.subr.mxu0 0.0
    %239 = vmatpush1.msra.mxu0 0.0
    %240 = vmatprep.subr.mxu0 0.0
    %241 = vmatpush1.msra.mxu0 0.0
    %242 = vmatprep.subr.mxu0 0.0
    %243 = vmatpush1.msra.mxu0 0.0
    %244 = vmatprep.subr.mxu0 0.0
    %245 = vmatpush1.msra.mxu0 0.0
    %246 = vmatprep.subr.mxu0 0.0
    %247 = vmatpush1.msra.mxu0 0.0
    %248 = vmatprep.subr.mxu0 0.0
    %249 = vmatpush1.msra.mxu0 0.0
    %250 = vmatprep.subr.mxu0 0.0
    %251 = vmatpush1.msra.mxu0 0.0
    %252 = vmatprep.subr.mxu0 0.0
    %253 = vmatpush1.msra.mxu0 0.0
    %254 = vmatprep.subr.mxu0 0.0
    %255 = vmatpush1.msra.mxu0 0.0
    %256 = vmatprep.subr.mxu0 0.0
    %257 = vmatpush1.msra.mxu0 0.0
    %258 = vmatprep.subr.mxu0 0.0
    %259 = vmatpush1.msra.mxu0 0.0
    %260 = vmatprep.subr.mxu0 0.0
    %261 = vmatpush1.msra.mxu0 0.0
    %262 = vmatprep.subr.mxu0 0.0
    %263 = vmatpush1.msra.mxu0 0.0
    %264 = vmatprep.subr.mxu0 0.0
    %265 = vmatpush1.msra.mxu0 0.0
    %266 = vmatprep.subr.mxu0 0.0
    %267 = vmatpush1.msra.mxu0 0.0
    %268 = vmatprep.subr.mxu0 0.0
    %269 = vmatpush1.msra.mxu0 0.0
    %270 = vmatprep.mubr.f32.mxu0 0.0
    %271 = vmatmul.mubr.f32.gmra.mrb[0].mxu0 %v182
    %v272 = vpop.f32.mrb[0].mxu0
    %v273 = vadd.f32 0.0, %v272
    %v274 = vpop.f32.mrb[0].mxu0
    %v275 = vadd.f32 0.0, %v274
    %276 = vmatprep.mubr.f32.mxu0 0.0
    %277 = vmatmul.mubr.f32.gmra.mrb[0].mxu0 %v185
    %v278 = vpop.f32.mrb[0].mxu0
    %v279 = vadd.f32 0.0, %v278
    %v280 = vpop.f32.mrb[0].mxu0
    %v281 = vadd.f32 0.0, %v280
    %282 = vmatprep.mubr.f32.mxu0 0.0
    %283 = vmatmul.mubr.f32.gmra.mrb[0].mxu0 %v188
    %v284 = vpop.f32.mrb[0].mxu0
    %v285 = vadd.f32 0.0, %v284
    %v286 = vpop.f32.mrb[0].mxu0
    %v287 = vadd.f32 0.0, %v286
    %288 = vdwg.mxu0
    %289 = vmatprep.subr.mxu0 %v168
    %290 = vmatpush1.msra.mxu0 %v167
    %291 = vmatprep.subr.mxu0 %v173
    %292 = vmatpush1.msra.mxu0 %v172
    %293 = vmatprep.subr.mxu0 %v201
    %294 = vmatpush1.msra.mxu0 %v198
    %295 = vmatprep.subr.mxu0 0.0
    %296 = vmatpush1.msra.mxu0 0.0
    %297 = vmatprep.subr.mxu0 0.0
    %298 = vmatpush1.msra.mxu0 0.0
    %299 = vmatprep.subr.mxu0 0.0
    %300 = vmatpush1.msra.mxu0 0.0
    %301 = vmatprep.subr.mxu0 0.0
    %302 = vmatpush1.msra.mxu0 0.0
    %303 = vmatprep.subr.mxu0 0.0
    %304 = vmatpush1.msra.mxu0 0.0
    %305 = vmatprep.subr.mxu0 0.0
    %306 = vmatpush1.msra.mxu0 0.0
    %307 = vmatprep.subr.mxu0 0.0
    %308 = vmatpush1.msra.mxu0 0.0
    %309 = vmatprep.subr.mxu0 0.0
    %310 = vmatpush1.msra.mxu0 0.0
    %311 = vmatprep.subr.mxu0 0.0
    %312 = vmatpush1.msra.mxu0 0.0
    %313 = vmatprep.subr.mxu0 0.0
    %314 = vmatpush1.msra.mxu0 0.0
    %315 = vmatprep.subr.mxu0 0.0
    %316 = vmatpush1.msra.mxu0 0.0
    %317 = vmatprep.subr.mxu0 0.0
    %318 = vmatpush1.msra.mxu0 0.0
    %319 = vmatprep.subr.mxu0 0.0
    %320 = vmatpush1.msra.mxu0 0.0
    %321 = vmatprep.subr.mxu0 0.0
    %322 = vmatpush1.msra.mxu0 0.0
    %323 = vmatprep.subr.mxu0 0.0
    %324 = vmatpush1.msra.mxu0 0.0
    %325 = vmatprep.subr.mxu0 0.0
    %326 = vmatpush1.msra.mxu0 0.0
    %327 = vmatprep.subr.mxu0 0.0
    %328 = vmatpush1.msra.mxu0 0.0
    %329 = vmatprep.subr.mxu0 0.0
    %330 = vmatpush1.msra.mxu0 0.0
    %331 = vmatprep.subr.mxu0 0.0
    %332 = vmatpush1.msra.mxu0 0.0
    %333 = vmatprep.subr.mxu0 0.0
    %334 = vmatpush1.msra.mxu0 0.0
    %335 = vmatprep.subr.mxu0 0.0
    %336 = vmatpush1.msra.mxu0 0.0
    %337 = vmatprep.subr.mxu0 0.0
    %338 = vmatpush1.msra.mxu0 0.0
    %339 = vmatprep.subr.mxu0 0.0
    %340 = vmatpush1.msra.mxu0 0.0
    %341 = vmatprep.subr.mxu0 0.0
    %342 = vmatpush1.msra.mxu0 0.0
    %343 = vmatprep.subr.mxu0 0.0
    %344 = vmatpush1.msra.mxu0 0.0
    %345 = vmatprep.subr.mxu0 0.0
    %346 = vmatpush1.msra.mxu0 0.0
    %347 = vmatprep.subr.mxu0 0.0
    %348 = vmatpush1.msra.mxu0 0.0
    %349 = vmatprep.subr.mxu0 0.0
    %350 = vmatpush1.msra.mxu0 0.0
    %351 = vmatprep.subr.mxu0 0.0
    %352 = vmatpush1.msra.mxu0 0.0
    %353 = vmatprep.mubr.f32.mxu0 0.0
    %354 = vmatmul.mubr.f32.gmra.mrb[0].mxu0 %v182
    %v355 = vpop.f32.mrb[0].mxu0
    %v356 = vadd.f32 0.0, %v355
    %v357 = vpop.f32.mrb[0].mxu0
    %v358 = vadd.f32 0.0, %v357
    %359 = vmatprep.mubr.f32.mxu0 0.0
    %360 = vmatmul.mubr.f32.gmra.mrb[0].mxu0 %v185
    %v361 = vpop.f32.mrb[0].mxu0
    %v362 = vadd.f32 0.0, %v361
    %v363 = vpop.f32.mrb[0].mxu0
    %v364 = vadd.f32 0.0, %v363
    %365 = vmatprep.mubr.f32.mxu0 0.0
    %366 = vmatmul.mubr.f32.gmra.mrb[0].mxu0 %v188
    %v367 = vpop.f32.mrb[0].mxu0
    %v368 = vadd.f32 0.0, %v367
    %v369 = vpop.f32.mrb[0].mxu0
    %v370 = vadd.f32 0.0, %v369
    %371 = vdwg.mxu0
    %372 = vmatprep.subr.mxu0 0.0
    %373 = vmatpush1.msra.mxu0 %v169
    %374 = vmatprep.subr.mxu0 0.0
    %375 = vmatpush1.msra.mxu0 %v174
    %376 = vmatprep.subr.mxu0 0.0
    %377 = vmatpush1.msra.mxu0 %v204
    %378 = vmatprep.subr.mxu0 0.0
    %379 = vmatpush1.msra.mxu0 0.0
    %380 = vmatprep.subr.mxu0 0.0
    %381 = vmatpush1.msra.mxu0 0.0
    %382 = vmatprep.subr.mxu0 0.0
    %383 = vmatpush1.msra.mxu0 0.0
    %384 = vmatprep.subr.mxu0 0.0
    %385 = vmatpush1.msra.mxu0 0.0
    %386 = vmatprep.subr.mxu0 0.0
    %387 = vmatpush1.msra.mxu0 0.0
    %388 = vmatprep.subr.mxu0 0.0
    %389 = vmatpush1.msra.mxu0 0.0
    %390 = vmatprep.subr.mxu0 0.0
    %391 = vmatpush1.msra.mxu0 0.0
    %392 = vmatprep.subr.mxu0 0.0
    %393 = vmatpush1.msra.mxu0 0.0
    %394 = vmatprep.subr.mxu0 0.0
    %395 = vmatpush1.msra.mxu0 0.0
    %396 = vmatprep.subr.mxu0 0.0
    %397 = vmatpush1.msra.mxu0 0.0
    %398 = vmatprep.subr.mxu0 0.0
    %399 = vmatpush1.msra.mxu0 0.0
    %400 = vmatprep.subr.mxu0 0.0
    %401 = vmatpush1.msra.mxu0 0.0
    %402 = vmatprep.subr.mxu0 0.0
    %403 = vmatpush1.msra.mxu0 0.0
    %404 = vmatprep.subr.mxu0 0.0
    %405 = vmatpush1.msra.mxu0 0.0
    %406 = vmatprep.subr.mxu0 0.0
    %407 = vmatpush1.msra.mxu0 0.0
    %408 = vmatprep.subr.mxu0 0.0
    %409 = vmatpush1.msra.mxu0 0.0
    %410 = vmatprep.subr.mxu0 0.0
    %411 = vmatpush1.msra.mxu0 0.0
    %412 = vmatprep.subr.mxu0 0.0
    %413 = vmatpush1.msra.mxu0 0.0
    %414 = vmatprep.subr.mxu0 0.0
    %415 = vmatpush1.msra.mxu0 0.0
    %416 = vmatprep.subr.mxu0 0.0
    %417 = vmatpush1.msra.mxu0 0.0
    %418 = vmatprep.subr.mxu0 0.0
    %419 = vmatpush1.msra.mxu0 0.0
    %420 = vmatprep.subr.mxu0 0.0
    %421 = vmatpush1.msra.mxu0 0.0
    %422 = vmatprep.subr.mxu0 0.0
    %423 = vmatpush1.msra.mxu0 0.0
    %424 = vmatprep.subr.mxu0 0.0
    %425 = vmatpush1.msra.mxu0 0.0
    %426 = vmatprep.subr.mxu0 0.0
    %427 = vmatpush1.msra.mxu0 0.0
    %428 = vmatprep.subr.mxu0 0.0
    %429 = vmatpush1.msra.mxu0 0.0
    %430 = vmatprep.subr.mxu0 0.0
    %431 = vmatpush1.msra.mxu0 0.0
    %432 = vmatprep.subr.mxu0 0.0
    %433 = vmatpush1.msra.mxu0 0.0
    %434 = vmatprep.subr.mxu0 0.0
    %435 = vmatpush1.msra.mxu0 0.0
    %436 = vmatprep.mubr.f32.mxu0 0.0
    %437 = vmatmul.mubr.f32.gmra.mrb[0].mxu0 %v182
    %v438 = vpop.f32.mrb[0].mxu0
    %v439 = vadd.f32 0.0, %v438
    %v440 = vpop.f32.mrb[0].mxu0
    %441 = vmatprep.mubr.f32.mxu0 0.0
    %442 = vmatmul.mubr.f32.gmra.mrb[0].mxu0 %v185
    %v443 = vpop.f32.mrb[0].mxu0
    %v444 = vadd.f32 0.0, %v443
    %v445 = vpop.f32.mrb[0].mxu0
    %446 = vmatprep.mubr.f32.mxu0 0.0
    %447 = vmatmul.mubr.f32.gmra.mrb[0].mxu0 %v188
    %v448 = vpop.f32.mrb[0].mxu0
    %v449 = vadd.f32 0.0, %v448
    %v450 = vpop.f32.mrb[0].mxu0
    %451 = vdwg.mxu0
    %452 = vset.pattern.permute.xlu0 3
    %453 = vperm.xlu0 %452, %v20
    %v454 = vpop.permute.xlu0 %453
    %456 = vset.pattern.permute.xlu0 3
    %457 = vperm.xlu0 %456, %v21
    %v458 = vpop.permute.xlu0 %457
    %460 = vset.pattern.permute.xlu0 3
    %461 = vperm.xlu0 %460, %v22
    %v462 = vpop.permute.xlu0 %461
    %v464 = vadd.f32 %v273, %v454
    %v465 = vadd.f32 %v275, %v454
    %v466 = vadd.f32 %v279, %v458
    %v467 = vadd.f32 %v281, %v458
    %v468 = vadd.f32 %v285, %v462
    %v469 = vadd.f32 %v287, %v462
    %v470 = vtanh.pop %v464
    %v471 = vtanh.pop %v465
    %v472 = vtanh.pop %v466
    %v473 = vtanh.pop %v467
    %v474 = vtanh.pop %v468
    %v475 = vtanh.pop %v469
    %v476 = vmul.f32 %v470, %v470
    %v477 = vmul.f32 %v472, %v472
    %v478 = vmul.f32 %v474, %v474
    %v479 = vsub.f32 1.0, %v476
    %v480 = vsub.f32 1.0, %v477
    %v481 = vsub.f32 1.0, %v478
    %482 = vst [vmem:[#allocation2] sm:$0xff] %v470
    %483 = vst [vmem:[#allocation2 + $0x8] sm:$0xff] %v471
    %484 = vst [vmem:[#allocation2 + $0x28] sm:$0xff] %v472
    %485 = vst [vmem:[#allocation2 + $0x30] sm:$0xff] %v473
    %486 = vst [vmem:[#allocation2 + $0x50] sm:$0xf] %v474
    %487 = vst [vmem:[#allocation2 + $0x58] sm:$0xf] %v475
    %v488 = vmul.f32 %v479, %v356
    %v489 = vmul.f32 %v480, %v362
    %v490 = vmul.f32 %v481, %v368
    %491 = vst [vmem:[#allocation2 + $0x10] sm:$0xff] %v488
    %492 = vst [vmem:[#allocation2 + $0x38] sm:$0xff] %v489
    %493 = vst [vmem:[#allocation2 + $0x60] sm:$0xf] %v490
    %v494 = vmul.f32 %v479, %v358
    %v495 = vmul.f32 %v480, %v364
    %v496 = vmul.f32 %v481, %v370
    %497 = vst [vmem:[#allocation2 + $0x18] sm:$0xff] %v494
    %498 = vst [vmem:[#allocation2 + $0x40] sm:$0xff] %v495
    %499 = vst [vmem:[#allocation2 + $0x68] sm:$0xf] %v496
    %v500 = vmul.f32 %v470, 2.0
    %v501 = vmul.f32 %v472, 2.0
    %v502 = vmul.f32 %v474, 2.0
    %v503 = vmul.f32 %v358, %v358
    %v504 = vmul.f32 %v364, %v364
    %v505 = vmul.f32 %v370, %v370
    %v506 = vmul.f32 %v500, %v503
    %v507 = vmul.f32 %v501, %v504
    %v508 = vmul.f32 %v502, %v505
    %v509 = vsub.f32 %v439, %v506
    %v510 = vsub.f32 %v444, %v507
    %v511 = vsub.f32 %v449, %v508
    %v512 = vmul.f32 %v479, %v509
    %v513 = vmul.f32 %v480, %v510
    %v514 = vmul.f32 %v481, %v511
    %515 = vst [vmem:[#allocation2 + $0x20] sm:$0xff] %v512
    %516 = vst [vmem:[#allocation2 + $0x48] sm:$0xff] %v513
    %517 = vst [vmem:[#allocation2 + $0x70] sm:$0xf] %v514
    %s518 = scalar_lea.vmem %s2, 24
    %v519 = vld [vmem:[%s518] sm:$0xff]
    %v520 = vld [vmem:[%s518 + $0x8] sm:$0xff]
    %v521 = vld [vmem:[%s518 + $0x10] sm:$0xf]
    %v522 = vld [vmem:[#allocation2] sm:$0xff]
    %v523 = vld [vmem:[#allocation2 + $0x8] sm:$0xff]
    %v524 = vld [vmem:[#allocation2 + $0x10] sm:$0xff]
    %v525 = vld [vmem:[#allocation2 + $0x18] sm:$0xff]
    %v526 = vld [vmem:[#allocation2 + $0x20] sm:$0xff]
    %v527 = vld [vmem:[#allocation2 + $0x28] sm:$0xff]
    %v528 = vld [vmem:[#allocation2 + $0x30] sm:$0xff]
    %v529 = vld [vmem:[#allocation2 + $0x38] sm:$0xff]
    %v530 = vld [vmem:[#allocation2 + $0x40] sm:$0xff]
    %v531 = vld [vmem:[#allocation2 + $0x48] sm:$0xff]
    %v532 = vld [vmem:[#allocation2 + $0x50] sm:$0xf]
    %v533 = vld [vmem:[#allocation2 + $0x58] sm:$0xf]
    %v534 = vld [vmem:[#allocation2 + $0x60] sm:$0xf]
    %v535 = vld [vmem:[#allocation2 + $0x68] sm:$0xf]
    %v536 = vld [vmem:[#allocation2 + $0x70] sm:$0xf]
    %v538 = vsel %vm180, %v519, 0
    %v541 = vsel %vm180, %v520, 0
    %v544 = vsel %vm180, %v521, 0
    %v547 = vsel %vm190, %v532, 0
    %v550 = vsel %vm190, %v533, 0
    %v553 = vsel %vm190, %v534, 0
    %v556 = vsel %vm190, %v535, 0
    %v559 = vsel %vm190, %v536, 0
    %561 = vmatprep.subr.mxu0 %v523
    %562 = vmatpush1.msra.mxu0 %v522
    %563 = vmatprep.subr.mxu0 %v528
    %564 = vmatpush1.msra.mxu0 %v527
    %565 = vmatprep.subr.mxu0 %v550
    %566 = vmatpush1.msra.mxu0 %v547
    %567 = vmatprep.subr.mxu0 0.0
    %568 = vmatpush1.msra.mxu0 0.0
    %569 = vmatprep.subr.mxu0 0.0
    %570 = vmatpush1.msra.mxu0 0.0
    %571 = vmatprep.subr.mxu0 0.0
    %572 = vmatpush1.msra.mxu0 0.0
    %573 = vmatprep.subr.mxu0 0.0
    %574 = vmatpush1.msra.mxu0 0.0
    %575 = vmatprep.subr.mxu0 0.0
    %576 = vmatpush1.msra.mxu0 0.0
    %577 = vmatprep.subr.mxu0 0.0
    %578 = vmatpush1.msra.mxu0 0.0
    %579 = vmatprep.subr.mxu0 0.0
    %580 = vmatpush1.msra.mxu0 0.0
    %581 = vmatprep.subr.mxu0 0.0
    %582 = vmatpush1.msra.mxu0 0.0
    %583 = vmatprep.subr.mxu0 0.0
    %584 = vmatpush1.msra.mxu0 0.0
    %585 = vmatprep.subr.mxu0 0.0
    %586 = vmatpush1.msra.mxu0 0.0
    %587 = vmatprep.subr.mxu0 0.0
    %588 = vmatpush1.msra.mxu0 0.0
    %589 = vmatprep.subr.mxu0 0.0
    %590 = vmatpush1.msra.mxu0 0.0
    %591 = vmatprep.subr.mxu0 0.0
    %592 = vmatpush1.msra.mxu0 0.0
    %593 = vmatprep.subr.mxu0 0.0
    %594 = vmatpush1.msra.mxu0 0.0
    %595 = vmatprep.subr.mxu0 0.0
    %596 = vmatpush1.msra.mxu0 0.0
    %597 = vmatprep.subr.mxu0 0.0
    %598 = vmatpush1.msra.mxu0 0.0
    %599 = vmatprep.subr.mxu0 0.0
    %600 = vmatpush1.msra.mxu0 0.0
    %601 = vmatprep.subr.mxu0 0.0
    %602 = vmatpush1.msra.mxu0 0.0
    %603 = vmatprep.subr.mxu0 0.0
    %604 = vmatpush1.msra.mxu0 0.0
    %605 = vmatprep.subr.mxu0 0.0
    %606 = vmatpush1.msra.mxu0 0.0
    %607 = vmatprep.subr.mxu0 0.0
    %608 = vmatpush1.msra.mxu0 0.0
    %609 = vmatprep.subr.mxu0 0.0
    %610 = vmatpush1.msra.mxu0 0.0
    %611 = vmatprep.subr.mxu0 0.0
    %612 = vmatpush1.msra.mxu0 0.0
    %613 = vmatprep.subr.mxu0 0.0
    %614 = vmatpush1.msra.mxu0 0.0
    %615 = vmatprep.subr.mxu0 0.0
    %616 = vmatpush1.msra.mxu0 0.0
    %617 = vmatprep.subr.mxu0 0.0
    %618 = vmatpush1.msra.mxu0 0.0
    %619 = vmatprep.subr.mxu0 0.0
    %620 = vmatpush1.msra.mxu0 0.0
    %621 = vmatprep.subr.mxu0 0.0
    %622 = vmatpush1.msra.mxu0 0.0
    %623 = vmatprep.subr.mxu0 0.0
    %624 = vmatpush1.msra.mxu0 0.0
    %625 = vmatprep.mubr.f32.mxu0 0.0
    %626 = vmatmul.mubr.f32.gmra.mrb[0].mxu0 %v538
    %v627 = vpop.f32.mrb[0].mxu0
    %v628 = vadd.f32 0.0, %v627
    %v629 = vpop.f32.mrb[0].mxu0
    %v630 = vadd.f32 0.0, %v629
    %631 = vmatprep.mubr.f32.mxu0 0.0
    %632 = vmatmul.mubr.f32.gmra.mrb[0].mxu0 %v541
    %v633 = vpop.f32.mrb[0].mxu0
    %v634 = vadd.f32 0.0, %v633
    %v635 = vpop.f32.mrb[0].mxu0
    %v636 = vadd.f32 0.0, %v635
    %637 = vmatprep.mubr.f32.mxu0 0.0
    %638 = vmatmul.mubr.f32.gmra.mrb[0].mxu0 %v544
    %v639 = vpop.f32.mrb[0].mxu0
    %v640 = vadd.f32 0.0, %v639
    %v641 = vpop.f32.mrb[0].mxu0
    %v642 = vadd.f32 0.0, %v641
    %643 = vdwg.mxu0
    %644 = vmatprep.subr.mxu0 %v525
    %645 = vmatpush1.msra.mxu0 %v524
    %646 = vmatprep.subr.mxu0 %v530
    %647 = vmatpush1.msra.mxu0 %v529
    %648 = vmatprep.subr.mxu0 %v556
    %649 = vmatpush1.msra.mxu0 %v553
    %650 = vmatprep.subr.mxu0 0.0
    %651 = vmatpush1.msra.mxu0 0.0
    %652 = vmatprep.subr.mxu0 0.0
    %653 = vmatpush1.msra.mxu0 0.0
    %654 = vmatprep.subr.mxu0 0.0
    %655 = vmatpush1.msra.mxu0 0.0
    %656 = vmatprep.subr.mxu0 0.0
    %657 = vmatpush1.msra.mxu0 0.0
    %658 = vmatprep.subr.mxu0 0.0
    %659 = vmatpush1.msra.mxu0 0.0
    %660 = vmatprep.subr.mxu0 0.0
    %661 = vmatpush1.msra.mxu0 0.0
    %662 = vmatprep.subr.mxu0 0.0
    %663 = vmatpush1.msra.mxu0 0.0
    %664 = vmatprep.subr.mxu0 0.0
    %665 = vmatpush1.msra.mxu0 0.0
    %666 = vmatprep.subr.mxu0 0.0
    %667 = vmatpush1.msra.mxu0 0.0
    %668 = vmatprep.subr.mxu0 0.0
    %669 = vmatpush1.msra.mxu0 0.0
    %670 = vmatprep.subr.mxu0 0.0
    %671 = vmatpush1.msra.mxu0 0.0
    %672 = vmatprep.subr.mxu0 0.0
    %673 = vmatpush1.msra.mxu0 0.0
    %674 = vmatprep.subr.mxu0 0.0
    %675 = vmatpush1.msra.mxu0 0.0
    %676 = vmatprep.subr.mxu0 0.0
    %677 = vmatpush1.msra.mxu0 0.0
    %678 = vmatprep.subr.mxu0 0.0
    %679 = vmatpush1.msra.mxu0 0.0
    %680 = vmatprep.subr.mxu0 0.0
    %681 = vmatpush1.msra.mxu0 0.0
    %682 = vmatprep.subr.mxu0 0.0
    %683 = vmatpush1.msra.mxu0 0.0
    %684 = vmatprep.subr.mxu0 0.0
    %685 = vmatpush1.msra.mxu0 0.0
    %686 = vmatprep.subr.mxu0 0.0
    %687 = vmatpush1.msra.mxu0 0.0
    %688 = vmatprep.subr.mxu0 0.0
    %689 = vmatpush1.msra.mxu0 0.0
    %690 = vmatprep.subr.mxu0 0.0
    %691 = vmatpush1.msra.mxu0 0.0
    %692 = vmatprep.subr.mxu0 0.0
    %693 = vmatpush1.msra.mxu0 0.0
    %694 = vmatprep.subr.mxu0 0.0
    %695 = vmatpush1.msra.mxu0 0.0
    %696 = vmatprep.subr.mxu0 0.0
    %697 = vmatpush1.msra.mxu0 0.0
    %698 = vmatprep.subr.mxu0 0.0
    %699 = vmatpush1.msra.mxu0 0.0
    %700 = vmatprep.subr.mxu0 0.0
    %701 = vmatpush1.msra.mxu0 0.0
    %702 = vmatprep.subr.mxu0 0.0
    %703 = vmatpush1.msra.mxu0 0.0
    %704 = vmatprep.subr.mxu0 0.0
    %705 = vmatpush1.msra.mxu0 0.0
    %706 = vmatprep.subr.mxu0 0.0
    %707 = vmatpush1.msra.mxu0 0.0
    %708 = vmatprep.mubr.f32.mxu0 0.0
    %709 = vmatmul.mubr.f32.gmra.mrb[0].mxu0 %v538
    %v710 = vpop.f32.mrb[0].mxu0
    %v711 = vadd.f32 0.0, %v710
    %v712 = vpop.f32.mrb[0].mxu0
    %v713 = vadd.f32 0.0, %v712
    %714 = vmatprep.mubr.f32.mxu0 0.0
    %715 = vmatmul.mubr.f32.gmra.mrb[0].mxu0 %v541
    %v716 = vpop.f32.mrb[0].mxu0
    %v717 = vadd.f32 0.0, %v716
    %v718 = vpop.f32.mrb[0].mxu0
    %v719 = vadd.f32 0.0, %v718
    %720 = vmatprep.mubr.f32.mxu0 0.0
    %721 = vmatmul.mubr.f32.gmra.mrb[0].mxu0 %v544
    %v722 = vpop.f32.mrb[0].mxu0
    %v723 = vadd.f32 0.0, %v722
    %v724 = vpop.f32.mrb[0].mxu0
    %v725 = vadd.f32 0.0, %v724
    %726 = vdwg.mxu0
    %727 = vmatprep.subr.mxu0 0.0
    %728 = vmatpush1.msra.mxu0 %v526
    %729 = vmatprep.subr.mxu0 0.0
    %730 = vmatpush1.msra.mxu0 %v531
    %731 = vmatprep.subr.mxu0 0.0
    %732 = vmatpush1.msra.mxu0 %v559
    %733 = vmatprep.subr.mxu0 0.0
    %734 = vmatpush1.msra.mxu0 0.0
    %735 = vmatprep.subr.mxu0 0.0
    %736 = vmatpush1.msra.mxu0 0.0
    %737 = vmatprep.subr.mxu0 0.0
    %738 = vmatpush1.msra.mxu0 0.0
    %739 = vmatprep.subr.mxu0 0.0
    %740 = vmatpush1.msra.mxu0 0.0
    %741 = vmatprep.subr.mxu0 0.0
    %742 = vmatpush1.msra.mxu0 0.0
    %743 = vmatprep.subr.mxu0 0.0
    %744 = vmatpush1.msra.mxu0 0.0
    %745 = vmatprep.subr.mxu0 0.0
    %746 = vmatpush1.msra.mxu0 0.0
    %747 = vmatprep.subr.mxu0 0.0
    %748 = vmatpush1.msra.mxu0 0.0
    %749 = vmatprep.subr.mxu0 0.0
    %750 = vmatpush1.msra.mxu0 0.0
    %751 = vmatprep.subr.mxu0 0.0
    %752 = vmatpush1.msra.mxu0 0.0
    %753 = vmatprep.subr.mxu0 0.0
    %754 = vmatpush1.msra.mxu0 0.0
    %755 = vmatprep.subr.mxu0 0.0
    %756 = vmatpush1.msra.mxu0 0.0
    %757 = vmatprep.subr.mxu0 0.0
    %758 = vmatpush1.msra.mxu0 0.0
    %759 = vmatprep.subr.mxu0 0.0
    %760 = vmatpush1.msra.mxu0 0.0
    %761 = vmatprep.subr.mxu0 0.0
    %762 = vmatpush1.msra.mxu0 0.0
    %763 = vmatprep.subr.mxu0 0.0
    %764 = vmatpush1.msra.mxu0 0.0
    %765 = vmatprep.subr.mxu0 0.0
    %766 = vmatpush1.msra.mxu0 0.0
    %767 = vmatprep.subr.mxu0 0.0
    %768 = vmatpush1.msra.mxu0 0.0
    %769 = vmatprep.subr.mxu0 0.0
    %770 = vmatpush1.msra.mxu0 0.0
    %771 = vmatprep.subr.mxu0 0.0
    %772 = vmatpush1.msra.mxu0 0.0
    %773 = vmatprep.subr.mxu0 0.0
    %774 = vmatpush1.msra.mxu0 0.0
    %775 = vmatprep.subr.mxu0 0.0
    %776 = vmatpush1.msra.mxu0 0.0
    %777 = vmatprep.subr.mxu0 0.0
    %778 = vmatpush1.msra.mxu0 0.0
    %779 = vmatprep.subr.mxu0 0.0
    %780 = vmatpush1.msra.mxu0 0.0
    %781 = vmatprep.subr.mxu0 0.0
    %782 = vmatpush1.msra.mxu0 0.0
    %783 = vmatprep.subr.mxu0 0.0
    %784 = vmatpush1.msra.mxu0 0.0
    %785 = vmatprep.subr.mxu0 0.0
    %786 = vmatpush1.msra.mxu0 0.0
    %787 = vmatprep.subr.mxu0 0.0
    %788 = vmatpush1.msra.mxu0 0.0
    %789 = vmatprep.subr.mxu0 0.0
    %790 = vmatpush1.msra.mxu0 0.0
    %791 = vmatprep.mubr.f32.mxu0 0.0
    %792 = vmatmul.mubr.f32.gmra.mrb[0].mxu0 %v538
    %v793 = vpop.f32.mrb[0].mxu0
    %v794 = vadd.f32 0.0, %v793
    %v795 = vpop.f32.mrb[0].mxu0
    %796 = vmatprep.mubr.f32.mxu0 0.0
    %797 = vmatmul.mubr.f32.gmra.mrb[0].mxu0 %v541
    %v798 = vpop.f32.mrb[0].mxu0
    %v799 = vadd.f32 0.0, %v798
    %v800 = vpop.f32.mrb[0].mxu0
    %801 = vmatprep.mubr.f32.mxu0 0.0
    %802 = vmatmul.mubr.f32.gmra.mrb[0].mxu0 %v544
    %v803 = vpop.f32.mrb[0].mxu0
    %v804 = vadd.f32 0.0, %v803
    %v805 = vpop.f32.mrb[0].mxu0
    %806 = vdwg.mxu0
    %807 = vset.pattern.permute.xlu0 4
    %808 = vperm.xlu0 %807, %v20
    %v809 = vpop.permute.xlu0 %808
    %811 = vset.pattern.permute.xlu0 4
    %812 = vperm.xlu0 %811, %v21
    %v813 = vpop.permute.xlu0 %812
    %815 = vset.pattern.permute.xlu0 4
    %816 = vperm.xlu0 %815, %v22
    %v817 = vpop.permute.xlu0 %816
    %v819 = vadd.f32 %v628, %v809
    %v820 = vadd.f32 %v630, %v809
    %v821 = vadd.f32 %v634, %v813
    %v822 = vadd.f32 %v636, %v813
    %v823 = vadd.f32 %v640, %v817
    %v824 = vadd.f32 %v642, %v817
    %v825 = vtanh.pop %v819
    %v826 = vtanh.pop %v820
    %v827 = vtanh.pop %v821
    %v828 = vtanh.pop %v822
    %v829 = vtanh.pop %v823
    %v830 = vtanh.pop %v824
    %v831 = vmul.f32 %v825, %v825
    %v832 = vmul.f32 %v827, %v827
    %v833 = vmul.f32 %v829, %v829
    %v834 = vsub.f32 1.0, %v831
    %v835 = vsub.f32 1.0, %v832
    %v836 = vsub.f32 1.0, %v833
    %837 = vst [vmem:[#allocation2] sm:$0xff] %v825
    %838 = vst [vmem:[#allocation2 + $0x8] sm:$0xff] %v826
    %839 = vst [vmem:[#allocation2 + $0x28] sm:$0xff] %v827
    %840 = vst [vmem:[#allocation2 + $0x30] sm:$0xff] %v828
    %841 = vst [vmem:[#allocation2 + $0x50] sm:$0xf] %v829
    %842 = vst [vmem:[#allocation2 + $0x58] sm:$0xf] %v830
    %v843 = vmul.f32 %v834, %v711
    %v844 = vmul.f32 %v835, %v717
    %v845 = vmul.f32 %v836, %v723
    %846 = vst [vmem:[#allocation2 + $0x10] sm:$0xff] %v843
    %847 = vst [vmem:[#allocation2 + $0x38] sm:$0xff] %v844
    %848 = vst [vmem:[#allocation2 + $0x60] sm:$0xf] %v845
    %v849 = vmul.f32 %v834, %v713
    %v850 = vmul.f32 %v835, %v719
    %v851 = vmul.f32 %v836, %v725
    %852 = vst [vmem:[#allocation2 + $0x18] sm:$0xff] %v849
    %853 = vst [vmem:[#allocation2 + $0x40] sm:$0xff] %v850
    %854 = vst [vmem:[#allocation2 + $0x68] sm:$0xf] %v851
    %v855 = vmul.f32 %v825, 2.0
    %v856 = vmul.f32 %v827, 2.0
    %v857 = vmul.f32 %v829, 2.0
    %v858 = vmul.f32 %v713, %v713
    %v859 = vmul.f32 %v719, %v719
    %v860 = vmul.f32 %v725, %v725
    %v861 = vmul.f32 %v855, %v858
    %v862 = vmul.f32 %v856, %v859
    %v863 = vmul.f32 %v857, %v860
    %v864 = vsub.f32 %v794, %v861
    %v865 = vsub.f32 %v799, %v862
    %v866 = vsub.f32 %v804, %v863
    %v867 = vmul.f32 %v834, %v864
    %v868 = vmul.f32 %v835, %v865
    %v869 = vmul.f32 %v836, %v866
    %870 = vst [vmem:[#allocation2 + $0x20] sm:$0xff] %v867
    %871 = vst [vmem:[#allocation2 + $0x48] sm:$0xff] %v868
    %872 = vst [vmem:[#allocation2 + $0x70] sm:$0xf] %v869
    %v873 = vld [vmem:[#allocation2] sm:$0xff]
    %v874 = vld [vmem:[#allocation2 + $0x8] sm:$0xff]
    %v875 = vld [vmem:[#allocation2 + $0x10] sm:$0xff]
    %v876 = vld [vmem:[#allocation2 + $0x18] sm:$0xff]
    %v877 = vld [vmem:[#allocation2 + $0x20] sm:$0xff]
    %v878 = vld [vmem:[#allocation2 + $0x28] sm:$0xff]
    %v879 = vld [vmem:[#allocation2 + $0x30] sm:$0xff]
    %v880 = vld [vmem:[#allocation2 + $0x38] sm:$0xff]
    %v881 = vld [vmem:[#allocation2 + $0x40] sm:$0xff]
    %v882 = vld [vmem:[#allocation2 + $0x48] sm:$0xff]
    %v883 = vld [vmem:[#allocation2 + $0x50] sm:$0xf]
    %v884 = vld [vmem:[#allocation2 + $0x58] sm:$0xf]
    %v885 = vld [vmem:[#allocation2 + $0x60] sm:$0xf]
    %v886 = vld [vmem:[#allocation2 + $0x68] sm:$0xf]
    %v887 = vld [vmem:[#allocation2 + $0x70] sm:$0xf]
    %888 = vset.pattern.permute.xlu0 5
    %889 = vperm.xlu0 %888, %v20
    %v890 = vpop.permute.xlu0 %889
    %892 = vset.pattern.permute.xlu0 5
    %893 = vperm.xlu0 %892, %v21
    %v894 = vpop.permute.xlu0 %893
    %896 = vset.pattern.permute.xlu0 5
    %897 = vperm.xlu0 %896, %v22
    %v898 = vpop.permute.xlu0 %897
    %v900 = vmul.f32 %v890, %v873
    %v901 = vmul.f32 %v890, %v874
    %v902 = vmul.f32 %v890, %v875
    %v903 = vmul.f32 %v890, %v876
    %v904 = vmul.f32 %v890, %v877
    %v905 = vmul.f32 %v894, %v878
    %v906 = vmul.f32 %v894, %v879
    %v907 = vmul.f32 %v894, %v880
    %v908 = vmul.f32 %v894, %v881
    %v909 = vmul.f32 %v894, %v882
    %v910 = vmul.f32 %v898, %v883
    %v911 = vmul.f32 %v898, %v884
    %v912 = vmul.f32 %v898, %v885
    %v913 = vmul.f32 %v898, %v886
    %v914 = vmul.f32 %v898, %v887
    %v915 = vadd.f32 %v900, %v905
    %v916 = vsel %vm190, %v910, 0.0
    %v917 = vadd.f32 %v915, %v916
    %v918 = vrot.slane %v917, 4
    %v919 = vadd.f32 %v917, %v918
    %v920 = vrot.slane %v919, 2
    %v921 = vadd.f32 %v919, %v920
    %v922 = vrot.slane %v921, 1
    %v923 = vadd.f32 %v921, %v922
    %v924 = vadd.f32 %v901, %v906
    %v925 = vsel %vm190, %v911, 0.0
    %v926 = vadd.f32 %v924, %v925
    %v927 = vrot.slane %v926, 4
    %v928 = vadd.f32 %v926, %v927
    %v929 = vrot.slane %v928, 2
    %v930 = vadd.f32 %v928, %v929
    %v931 = vrot.slane %v930, 1
    %v932 = vadd.f32 %v930, %v931
    %v933 = vadd.f32 %v902, %v907
    %v934 = vsel %vm190, %v912, 0.0
    %v935 = vadd.f32 %v933, %v934
    %v936 = vrot.slane %v935, 4
    %v937 = vadd.f32 %v935, %v936
    %v938 = vrot.slane %v937, 2
    %v939 = vadd.f32 %v937, %v938
    %v940 = vrot.slane %v939, 1
    %v941 = vadd.f32 %v939, %v940
    %v942 = vadd.f32 %v903, %v908
    %v943 = vsel %vm190, %v913, 0.0
    %v944 = vadd.f32 %v942, %v943
    %v945 = vrot.slane %v944, 4
    %v946 = vadd.f32 %v944, %v945
    %v947 = vrot.slane %v946, 2
    %v948 = vadd.f32 %v946, %v947
    %v949 = vrot.slane %v948, 1
    %v950 = vadd.f32 %v948, %v949
    %v951 = vadd.f32 %v904, %v909
    %v952 = vsel %vm190, %v914, 0.0
    %v953 = vadd.f32 %v951, %v952
    %v954 = vrot.slane %v953, 4
    %v955 = vadd.f32 %v953, %v954
    %v956 = vrot.slane %v955, 2
    %v957 = vadd.f32 %v955, %v956
    %v958 = vrot.slane %v957, 1
    %v959 = vadd.f32 %v957, %v958
    %960 = vset.pattern.permute.xlu0 6
    %961 = vperm.xlu0 %960, %v20
    %v962 = vpop.permute.xlu0 %961
    %v964 = vadd.f32 %v923, %v962
    %v965 = vadd.f32 %v932, %v962
    %v966 = vmul.f32 %v964, %v950
    %v967 = vadd.f32 %v941, %v966
    %v968 = vmul.f32 %v959, 0.003183099
    %v969 = vsub.f32 %v967, %v968
    %v970 = vmul.f32 %v969, %v969
    %v972 = vrot.slane %v970, 6
    %v974 = vmul.f32 %v18, %v972
    %v976 = vrot.slane %v974, 2
    %vm978 = vcmask 1040384
    %v979 = vsel %vm978, %v976, 0.0
    %980 = vadd.xlane.f32.xlu0 %v979
    %v981 = vpop.xlane.xlu0 %980
    %v982 = vrot.slane %v981, 4
    %v983 = vadd.f32 %v981, %v982
    %v984 = vrot.slane %v983, 2
    %v985 = vadd.f32 %v983, %v984
    %v986 = vrot.slane %v985, 1
    %v987 = vadd.f32 %v985, %v986
    %s988 = vtos %v987
    %v990 = vrot.slane %v19, 2
    %v992 = vsub.f32 %v965, %v990
    %v993 = vmul.f32 %v992, %v992
    %p994 = scmp.eq.s32.totalorder 0, 0
    %s995 = scalar_select %p994, 1.0, 0.0
    %v997 = vrot.slane %v993, 5
    %v999 = vmul.f32 %v19, %v997
    %v1001 = vrot.slane %v999, 3
    %v1003 = vsel %vm978, %v1001, 0.0
    %1004 = vadd.xlane.f32.xlu0 %v1003
    %v1005 = vpop.xlane.xlu0 %1004
    %v1006 = vrot.slane %v1005, 4
    %v1007 = vadd.f32 %v1005, %v1006
    %v1008 = vrot.slane %v1007, 2
    %v1009 = vadd.f32 %v1007, %v1008
    %v1010 = vrot.slane %v1009, 1
    %v1011 = vadd.f32 %v1009, %v1010
    %s1012 = vtos %v1011
    %s1013 = smul.f32 %s995, %s1012
    %v1014 = vrot.slane %v993, 4
    %v1016 = vmul.f32 %v19, %v1014
    %v1018 = vrot.slane %v1016, 4
    %v1020 = vsel %vm978, %v1018, 0.0
    %1021 = vadd.xlane.f32.xlu0 %v1020
    %v1022 = vpop.xlane.xlu0 %1021
    %v1023 = vrot.slane %v1022, 4
    %v1024 = vadd.f32 %v1022, %v1023
    %v1025 = vrot.slane %v1024, 2
    %v1026 = vadd.f32 %v1024, %v1025
    %v1027 = vrot.slane %v1026, 1
    %v1028 = vadd.f32 %v1026, %v1027
    %s1029 = vtos %v1028
    %s1030 = smul.f32 %s995, %s1029
    %v1031 = vlaneseq
    %v1032 = vand.u32 %v1031, 127
    %vm1033 = vcmp.eq.s32.totalorder %v1032, 0
    %v1034 = vstv %s988
    %v1035 = vsel %vm1033, %v1034, 0.0
    %vm1036 = vcmp.eq.s32.totalorder %v1032, 1
    %v1037 = vstv %s1013
    %v1038 = vsel %vm1036, %v1037, 0.0
    %v1039 = vadd.f32 %v1035, %v1038
    %vm1040 = vcmp.eq.s32.totalorder %v1032, 2
    %v1041 = vstv %s1030
    %v1042 = vsel %vm1040, %v1041, 0.0
    %v1043 = vadd.f32 %v1039, %v1042
    %1044 = vst [vmem:[#allocation3] sm:$0xff] %v1043
    // Predicated region
    $region18: #{tpu_custom_call.1} parent=1 // pred_check
      _
    $region19: #{tpu_custom_call.1} parent=1 // pred_check_branch
      %1046 = sbr.rel (0) target = $region21
    $region20: #{tpu_custom_call.1} parent=1 // pred_region
      %s1048 = ssub.s32 128, 128
      %1049 = vsyncadd [#allocation4], %s1048
      %s1051 = sshll.u32 [#allocation3], 4
      %s1052 = int_to_ptr.vmem [resolvable:$true] %s1051
      %1054 = dma.vmem_to_hbm [thread:$0]  %s1052, 128, %s4, [#allocation4]
    $region21: #{tpu_custom_call.1} parent=1 // pred_fallthru
      _
    // Predicated region
    $region22: #{tpu_custom_call.1} parent=1 // pred_check
      _
    $region23: #{tpu_custom_call.1} parent=1 // pred_check_branch
      %1056 = sbr.rel (0) target = $region25
    $region24: #{tpu_custom_call.1} parent=1 // pred_region
      %1057 = dma.done [#allocation4], 128
    $region25: #{tpu_custom_call.1} parent=1 // pred_fallthru
      _
    %1058 = vsyncpa [#allocation4], 1

</llo_original>
